<compile_context>
chip_gen: v7x
topology: tpu7x:2x2x1
jax: 0.10.0
libtpu: 0.0.40
codegen_flags: <defaults>
</compile_context>

<pallas_src>
import jax
import jax.numpy as jnp
from jax.experimental import pallas as pl
from jax.experimental.pallas import tpu as pltpu


def _mlp_kernel(xT_ref, w1_ref, b1_ref, w2_ref, b2_ref, w3_ref, b3_ref, o_ref):
    # Feature-major tile: columns are batch samples riding the MXU lane/N axis.
    xT = xT_ref[...]                                              # (input_dim, TB) bf16

    # Layer 1: (128, input_dim) @ (input_dim, TB) -> (128, TB), f32 accumulate.
    h1 = jnp.dot(w1_ref[...], xT, preferred_element_type=jnp.float32)
    h1 = jnp.maximum(h1 + b1_ref[...], 0.0)                       # (128,1) column bcast
    # Dropout(0.2): identity at inference.

    # Layer 2: (64, 128) @ (128, TB) -> (64, TB).
    h2 = jnp.dot(w2_ref[...], h1.astype(w2_ref.dtype),
                 preferred_element_type=jnp.float32)
    h2 = jnp.maximum(h2 + b2_ref[...], 0.0)
    # Dropout(0.2): identity at inference.

    # Layer 3: (1, 64) @ (64, TB) -> (1, TB) lane-dense row straight off the MXU.
    out = jnp.dot(w3_ref[...], h2.astype(w3_ref.dtype),
                  preferred_element_type=jnp.float32)
    o_ref[...] = (out + b3_ref[0]).astype(o_ref.dtype)


def airbnb_regressor_forward(x, params, *, block_b=2048, mxu_dtype=jnp.bfloat16):
    """x: [B, input_dim] float32.

    params: dict of w1,b1,w2,b2,w3,b3 with weights in the PyTorch
    (out_features, in_features) layout.

    mxu_dtype: operand dtype fed to the MXU (bf16 default; f32 accumulation is
    kept via preferred_element_type).  Use jnp.float32 for tighter numerics at
    a matmul-rate cost."""
    B, input_dim = x.shape
    w1, b1 = params["w1"], params["b1"]          # (128, input_dim), (128,)
    w2, b2 = params["w2"], params["b2"]          # (64, 128), (64,)
    w3, b3 = params["w3"], params["b3"]          # (1, 64), (1,)

    # Feature-major operands.  One wrapper-side transpose+cast of the
    # activations (fused by XLA); weights are tiny and stay VMEM-resident.
    xT = x.T.astype(mxu_dtype)                               # (input_dim, B)
    w1m = w1.astype(mxu_dtype)                               # (128, input_dim)
    w2m = w2.astype(mxu_dtype)                               # (64, 128)
    w3m = w3.reshape(1, -1).astype(mxu_dtype)                # (1, 64)
    b1c = b1.reshape(-1, 1).astype(jnp.float32)              # (128, 1)
    b2c = b2.reshape(-1, 1).astype(jnp.float32)              # (64, 1)
    b3s = b3.reshape(1).astype(jnp.float32)                  # SMEM scalar

    # Batch tile: multiple of 128 so the (1, TB) output block is lane-dense.
    TB = min(block_b, ((B + 127) // 128) * 128)
    TB = max(128, (TB // 128) * 128)
    nb = -(-B // TB)            # ceil-div; last block may be partial (no pad copy)

    flops = 2 * B * (input_dim * 128 + 128 * 64 + 64)
    bytes_accessed = int(
        B * input_dim * xT.dtype.itemsize                    # streamed activations
        + w1m.size * w1m.dtype.itemsize
        + w2m.size * w2m.dtype.itemsize
        + w3m.size * w3m.dtype.itemsize
        + (128 + 64 + 1) * 4                                  # biases
        + B * 4                                               # output
    )

    out_row = pl.pallas_call(
        _mlp_kernel,
        out_shape=jax.ShapeDtypeStruct((1, B), jnp.float32),
        grid=(nb,),
        in_specs=[
            pl.BlockSpec((input_dim, TB), lambda i: (0, i)),     # x^T: batch-tiled
            pl.BlockSpec(w1m.shape, lambda i: (0, 0)),           # weights resident
            pl.BlockSpec(b1c.shape, lambda i: (0, 0)),
            pl.BlockSpec(w2m.shape, lambda i: (0, 0)),
            pl.BlockSpec(b2c.shape, lambda i: (0, 0)),
            pl.BlockSpec(w3m.shape, lambda i: (0, 0)),
            pl.BlockSpec(memory_space=pltpu.MemorySpace.SMEM),   # b3 scalar
        ],
        out_specs=pl.BlockSpec((1, TB), lambda i: (0, i)),       # lane-dense store
        compiler_params=pltpu.CompilerParams(
            dimension_semantics=("parallel",),
        ),
        cost_estimate=pl.CostEstimate(
            flops=flops, transcendentals=0, bytes_accessed=bytes_accessed),
    )(xT, w1m, b1c, w2m, b2c, w3m, b3s)

    # (1, B) row -> (B, 1) column (pure relabel, no data reorder).
    return out_row.reshape(B, 1)


def init_params(key, input_dim):
    """Deterministic init mimicking nn.Linear's uniform(-1/sqrt(fan_in)) ranges.
    Weights are in PyTorch (out_features, in_features) layout."""
    k1, k2, k3, k4, k5, k6 = jax.random.split(key, 6)

    def lin(kw, kb, fan_in, fan_out):
        bound = 1.0 / jnp.sqrt(fan_in)
        w = jax.random.uniform(kw, (fan_out, fan_in), jnp.float32, -bound, bound)
        b = jax.random.uniform(kb, (fan_out,), jnp.float32, -bound, bound)
        return w, b

    w1, b1 = lin(k1, k2, input_dim, 128)
    w2, b2 = lin(k3, k4, 128, 64)
    w3, b3 = lin(k5, k6, 64, 1)
    return {"w1": w1, "b1": b1, "w2": w2, "b2": b2, "w3": w3, "b3": b3}


def reference_forward(x, params):
    h1 = jnp.maximum(x @ params["w1"].T + params["b1"], 0.0)
    h2 = jnp.maximum(h1 @ params["w2"].T + params["b2"], 0.0)
    return h2 @ params["w3"].T + params["b3"]


if __name__ == "__main__":
    key = jax.random.PRNGKey(0)
    kx, kp = jax.random.split(key)

    B, input_dim = 8, 16  # small tabular-regression batch
    x = jax.random.normal(kx, (B, input_dim), jnp.float32)
    params = init_params(kp, input_dim)

    out = jax.block_until_ready(airbnb_regressor_forward(x, params))
    ref = reference_forward(x, params)

    assert out.shape == (B, 1), out.shape
    max_err = float(jnp.max(jnp.abs(out - ref)))
    # bf16 MXU operands with f32 accumulation: a few-percent relative error
    # bound on O(1) outputs is comfortably inside 1e-1 (accuracy/perf trade-off
    # by design, not drift).
    assert max_err < 1e-1, max_err

    print("KERNEL_OK")
</pallas_src>

<mosaic_0001>
module attributes {stable_mosaic.version = 11 : i64} {
  func.func @_mlp_kernel(%arg0: i32, %arg1: memref<16x128xbf16, #tpu.memory_space<vmem>>, %arg2: memref<128x16xbf16, #tpu.memory_space<vmem>>, %arg3: memref<128x1xf32, #tpu.memory_space<vmem>>, %arg4: memref<64x128xbf16, #tpu.memory_space<vmem>>, %arg5: memref<64x1xf32, #tpu.memory_space<vmem>>, %arg6: memref<1x64xbf16, #tpu.memory_space<vmem>>, %arg7: memref<1xf32, #tpu.memory_space<smem>>, %arg8: memref<1x128xf32, #tpu.memory_space<vmem>>) attributes {dimension_semantics = [#tpu.dimension_semantics<parallel>], iteration_bounds = array<i64: 1>, scalar_prefetch = 0 : i64, scratch_operands = 0 : i64, tpu.core_type = #tpu.core_type<tc>, window_params = [{transform_indices = @transform_0, window_bounds = array<i64: 16, 128>}, {pipeline_mode = #tpu.pipeline_mode<synchronous>, transform_indices = @transform_1, window_bounds = array<i64: 128, 16>}, {pipeline_mode = #tpu.pipeline_mode<synchronous>, transform_indices = @transform_2, window_bounds = array<i64: 128, 1>}, {pipeline_mode = #tpu.pipeline_mode<synchronous>, transform_indices = @transform_3, window_bounds = array<i64: 64, 128>}, {pipeline_mode = #tpu.pipeline_mode<synchronous>, transform_indices = @transform_4, window_bounds = array<i64: 64, 1>}, {pipeline_mode = #tpu.pipeline_mode<synchronous>, transform_indices = @transform_5, window_bounds = array<i64: 1, 64>}, {transform_indices = @transform_6, window_bounds = array<i64: 1>}, {transform_indices = @transform_7, window_bounds = array<i64: 1, 128>}]} {
    %c0 = arith.constant 0 : index
    %c0_0 = arith.constant 0 : index
    %0 = vector.load %arg1[%c0, %c0_0] : memref<16x128xbf16, #tpu.memory_space<vmem>>, vector<16x128xbf16>
    %c0_1 = arith.constant 0 : index
    %c0_2 = arith.constant 0 : index
    %1 = vector.load %arg2[%c0_1, %c0_2] : memref<128x16xbf16, #tpu.memory_space<vmem>>, vector<128x16xbf16>
    %cst = arith.constant dense<0.000000e+00> : vector<128x128xf32>
    %2 = tpu.matmul %1, %0, %cst {dimension_numbers = #tpu.dot_dimension_numbers<[1], [0], [0], [1], [0, 0, 1, 1], [], []>} : vector<128x16xbf16>, vector<16x128xbf16>, vector<128x128xf32> -> vector<128x128xf32>
    %c0_3 = arith.constant 0 : index
    %c0_4 = arith.constant 0 : index
    %3 = vector.load %arg3[%c0_3, %c0_4] : memref<128x1xf32, #tpu.memory_space<vmem>>, vector<128x1xf32>
    %4 = vector.broadcast %3 : vector<128x1xf32> to vector<128x128xf32>
    %5 = arith.addf %2, %4 : vector<128x128xf32>
    %cst_5 = arith.constant 0.000000e+00 : f32
    %6 = vector.broadcast %cst_5 : f32 to vector<128x128xf32>
    %7 = arith.maximumf %5, %6 : vector<128x128xf32>
    %c0_6 = arith.constant 0 : index
    %c0_7 = arith.constant 0 : index
    %8 = vector.load %arg4[%c0_6, %c0_7] : memref<64x128xbf16, #tpu.memory_space<vmem>>, vector<64x128xbf16>
    %9 = arith.truncf %7 : vector<128x128xf32> to vector<128x128xbf16>
    %cst_8 = arith.constant dense<0.000000e+00> : vector<64x128xf32>
    %10 = tpu.matmul %8, %9, %cst_8 {dimension_numbers = #tpu.dot_dimension_numbers<[1], [0], [0], [1], [0, 0, 1, 1], [], []>} : vector<64x128xbf16>, vector<128x128xbf16>, vector<64x128xf32> -> vector<64x128xf32>
    %c0_9 = arith.constant 0 : index
    %c0_10 = arith.constant 0 : index
    %11 = vector.load %arg5[%c0_9, %c0_10] : memref<64x1xf32, #tpu.memory_space<vmem>>, vector<64x1xf32>
    %12 = vector.broadcast %11 : vector<64x1xf32> to vector<64x128xf32>
    %13 = arith.addf %10, %12 : vector<64x128xf32>
    %cst_11 = arith.constant 0.000000e+00 : f32
    %14 = vector.broadcast %cst_11 : f32 to vector<64x128xf32>
    %15 = arith.maximumf %13, %14 : vector<64x128xf32>
    %c0_12 = arith.constant 0 : index
    %c0_13 = arith.constant 0 : index
    %16 = vector.load %arg6[%c0_12, %c0_13] : memref<1x64xbf16, #tpu.memory_space<vmem>>, vector<1x64xbf16>
    %17 = arith.truncf %15 : vector<64x128xf32> to vector<64x128xbf16>
    %cst_14 = arith.constant dense<0.000000e+00> : vector<1x128xf32>
    %18 = tpu.matmul %16, %17, %cst_14 {dimension_numbers = #tpu.dot_dimension_numbers<[1], [0], [0], [1], [0, 0, 1, 1], [], []>} : vector<1x64xbf16>, vector<64x128xbf16>, vector<1x128xf32> -> vector<1x128xf32>
    %c0_15 = arith.constant 0 : index
    %19 = memref.load %arg7[%c0_15] : memref<1xf32, #tpu.memory_space<smem>>
    %20 = vector.broadcast %19 : f32 to vector<1x128xf32>
    %21 = arith.addf %18, %20 : vector<1x128xf32>
    %c0_16 = arith.constant 0 : index
    %c0_17 = arith.constant 0 : index
    %22 = vector.load %arg8[%c0_16, %c0_17] : memref<1x128xf32, #tpu.memory_space<vmem>>, vector<1x128xf32>
    tpu.vector_store %arg8[%c0_16, %c0_17], %21 {strides = array<i32>} : memref<1x128xf32, #tpu.memory_space<vmem>>, vector<1x128xf32>,
    return
  }
  func.func @transform_0(%arg0: i32) -> (i32, i32) {
    %c0_i32 = arith.constant 0 : i32
    %c0_i32_0 = arith.constant 0 : i32
    return %c0_i32, %arg0 : i32, i32
  }
  func.func @transform_1(%arg0: i32) -> (i32, i32) {
    %c0_i32 = arith.constant 0 : i32
    %c0_i32_0 = arith.constant 0 : i32
    %c0_i32_1 = arith.constant 0 : i32
    return %c0_i32, %c0_i32_0 : i32, i32
  }
  func.func @transform_2(%arg0: i32) -> (i32, i32) {
    %c0_i32 = arith.constant 0 : i32
    %c0_i32_0 = arith.constant 0 : i32
    %c0_i32_1 = arith.constant 0 : i32
    return %c0_i32, %c0_i32_0 : i32, i32
  }
  func.func @transform_3(%arg0: i32) -> (i32, i32) {
    %c0_i32 = arith.constant 0 : i32
    %c0_i32_0 = arith.constant 0 : i32
    %c0_i32_1 = arith.constant 0 : i32
    return %c0_i32, %c0_i32_0 : i32, i32
  }
  func.func @transform_4(%arg0: i32) -> (i32, i32) {
    %c0_i32 = arith.constant 0 : i32
    %c0_i32_0 = arith.constant 0 : i32
    %c0_i32_1 = arith.constant 0 : i32
    return %c0_i32, %c0_i32_0 : i32, i32
  }
  func.func @transform_5(%arg0: i32) -> (i32, i32) {
    %c0_i32 = arith.constant 0 : i32
    %c0_i32_0 = arith.constant 0 : i32
    %c0_i32_1 = arith.constant 0 : i32
    return %c0_i32, %c0_i32_0 : i32, i32
  }
  func.func @transform_6(%arg0: i32) -> i32 {
    %c0_i32 = arith.constant 0 : i32
    %c0_i32_0 = arith.constant 0 : i32
    return %c0_i32 : i32
  }
  func.func @transform_7(%arg0: i32) -> (i32, i32) {
    %c0_i32 = arith.constant 0 : i32
    %c0_i32_0 = arith.constant 0 : i32
    return %c0_i32, %arg0 : i32, i32
  }
}

</mosaic_0001>

<llo_original>
// kernel: tpu_custom_call.1
$region0: #{tpu_custom_call.1}
  #allocation0 [shape = 'u32[]', space=smem, size = 0x4, offset = 0x4, fixed_abs, tag = 'smem constant byte address 0x4 - core index']
  #allocation1 [shape = 'u32[144,128]{1,0:T(1,128)}', space=vmem, size = 0x12000, scoped, tag = 'internal scratch']
  #allocation2 [shape = 'f32[1]{0:T(128)S(6)}', space=smem, size = 0x200, scoped, tag = 'scoped memory for tpu_custom_call.1']
  %s0 = inlined_call_operand.vmem [shape: bf16[16,8], index: 0, kind: input, shape index: {}]
  %s1 = inlined_call_operand.vmem [shape: bf16[128,16], index: 1, kind: input, shape index: {}]
  %s2 = inlined_call_operand.vmem [shape: f32[128,1], index: 2, kind: input, shape index: {}]
  %s3 = inlined_call_operand.vmem [shape: bf16[64,128], index: 3, kind: input, shape index: {}]
  %s4 = inlined_call_operand.vmem [shape: f32[64,1], index: 4, kind: input, shape index: {}]
  %s5 = inlined_call_operand.vmem [shape: bf16[1,64], index: 5, kind: input, shape index: {}]
  %s6 = inlined_call_operand.<no memory space> [shape: f32[1], index: 6, kind: input, shape index: {}]
  %s7 = inlined_call_operand.hbm [shape: f32[1,8], index: 7, kind: output, shape index: {}]
  %s8 = sld [smem:[#allocation0]]
  $region38: #{tpu_custom_call.1} parent=0
    _
  %s10 = ssub.s32 1, %s8
  %s11 = scalar_select 0, %s10, %s8
  %12 = sst [smem:[#allocation2]] %s6
  $region1: #{tpu_custom_call.1} parent=0
    #allocation3 [shape = 'u8[512]{0}', space=vmem, size = 0x400, scoped, tag = 'output window, operand 0, single buffered']
    #allocation4 [shape = 's32[1]{0}', space=sflag, size = 0x4, scoped, tag = 'scoped memory for tpu_custom_call.1']
    %13 = vsyncpa [#allocation4], 0
    // Predicated region
    $region2: #{tpu_custom_call.1} parent=1 // pred_check
      _
    $region3: #{tpu_custom_call.1} parent=1 // pred_check_branch
      %15 = sbr.rel (0) target = $region5
    $region4: #{tpu_custom_call.1} parent=1 // pred_region
      _
    $region5: #{tpu_custom_call.1} parent=1 // pred_fallthru
      _
    // Predicated region
    $region6: #{tpu_custom_call.1} parent=1 // pred_check
      _
    $region7: #{tpu_custom_call.1} parent=1 // pred_check_branch
      %17 = sbr.rel (0) target = $region9
    $region8: #{tpu_custom_call.1} parent=1 // pred_region
      _
    $region9: #{tpu_custom_call.1} parent=1 // pred_fallthru
      _
    // Predicated region
    $region10: #{tpu_custom_call.1} parent=1 // pred_check
      _
    $region11: #{tpu_custom_call.1} parent=1 // pred_check_branch
      %19 = sbr.rel (0) target = $region13
    $region12: #{tpu_custom_call.1} parent=1 // pred_region
      _
    $region13: #{tpu_custom_call.1} parent=1 // pred_fallthru
      _
    // Predicated region
    $region14: #{tpu_custom_call.1} parent=1 // pred_check
      _
    $region15: #{tpu_custom_call.1} parent=1 // pred_check_branch
      %21 = sbr.rel (0) target = $region17
    $region16: #{tpu_custom_call.1} parent=1 // pred_region
      _
    $region17: #{tpu_custom_call.1} parent=1 // pred_fallthru
      _
    // Predicated region
    $region18: #{tpu_custom_call.1} parent=1 // pred_check
      _
    $region19: #{tpu_custom_call.1} parent=1 // pred_check_branch
      %23 = sbr.rel (0) target = $region21
    $region20: #{tpu_custom_call.1} parent=1 // pred_region
      _
    $region21: #{tpu_custom_call.1} parent=1 // pred_fallthru
      _
    // Predicated region
    $region22: #{tpu_custom_call.1} parent=1 // pred_check
      _
    $region23: #{tpu_custom_call.1} parent=1 // pred_check_branch
      %25 = sbr.rel (0) target = $region25
    $region24: #{tpu_custom_call.1} parent=1 // pred_region
      _
    $region25: #{tpu_custom_call.1} parent=1 // pred_fallthru
      _
    // Predicated region
    $region26: #{tpu_custom_call.1} parent=1 // pred_check
      _
    $region27: #{tpu_custom_call.1} parent=1 // pred_check_branch
      %27 = sbr.rel (0) target = $region29
    $region28: #{tpu_custom_call.1} parent=1 // pred_region
      _
    $region29: #{tpu_custom_call.1} parent=1 // pred_fallthru
      _
    %v29 = vld [vmem:[%s0] sm:$0xf]
    %v30 = vld [vmem:[%s0 + $0x4] sm:$0xf]
    %v31 = vld [vmem:[%s1] sm:$0xf]
    %v32 = vld [vmem:[%s1 + $0x4] sm:$0xf]
    %v33 = vld [vmem:[%s1 + $0x8] sm:$0xf]
    %v34 = vld [vmem:[%s1 + $0xc] sm:$0xf]
    %v35 = vld [vmem:[%s1 + $0x10] sm:$0xf]
    %v36 = vld [vmem:[%s1 + $0x14] sm:$0xf]
    %v37 = vld [vmem:[%s1 + $0x18] sm:$0xf]
    %v38 = vld [vmem:[%s1 + $0x1c] sm:$0xf]
    %v39 = vld [vmem:[%s1 + $0x20] sm:$0xf]
    %v40 = vld [vmem:[%s1 + $0x24] sm:$0xf]
    %v41 = vld [vmem:[%s1 + $0x28] sm:$0xf]
    %v42 = vld [vmem:[%s1 + $0x2c] sm:$0xf]
    %v43 = vld [vmem:[%s1 + $0x30] sm:$0xf]
    %v44 = vld [vmem:[%s1 + $0x34] sm:$0xf]
    %v45 = vld [vmem:[%s1 + $0x38] sm:$0xf]
    %v46 = vld [vmem:[%s1 + $0x3c] sm:$0xf]
    %v47 = vld [vmem:[%s2] sm:$0xff]
    %v48 = vld [vmem:[%s2 + $0x8] sm:$0xff]
    %v49 = vld [vmem:[%s2 + $0x10] sm:$0xff]
    %v50 = vld [vmem:[%s2 + $0x18] sm:$0xff]
    %v51 = vld [vmem:[%s2 + $0x20] sm:$0xff]
    %v52 = vld [vmem:[%s2 + $0x28] sm:$0xff]
    %v53 = vld [vmem:[%s2 + $0x30] sm:$0xff]
    %v54 = vld [vmem:[%s2 + $0x38] sm:$0xff]
    %v55 = vld [vmem:[%s2 + $0x40] sm:$0xff]
    %v56 = vld [vmem:[%s2 + $0x48] sm:$0xff]
    %v57 = vld [vmem:[%s2 + $0x50] sm:$0xff]
    %v58 = vld [vmem:[%s2 + $0x58] sm:$0xff]
    %v59 = vld [vmem:[%s2 + $0x60] sm:$0xff]
    %v60 = vld [vmem:[%s2 + $0x68] sm:$0xff]
    %v61 = vld [vmem:[%s2 + $0x70] sm:$0xff]
    %v62 = vld [vmem:[%s2 + $0x78] sm:$0xff]
    %64 = vset.pattern.permute.xlu0 0
    %65 = vperm.xlu0 %64, %v47
    %v66 = vpop.permute.xlu0 %65
    %69 = vset.pattern.permute.xlu0 0
    %70 = vperm.xlu0 %69, %v48
    %v71 = vpop.permute.xlu0 %70
    %74 = vset.pattern.permute.xlu0 0
    %75 = vperm.xlu0 %74, %v49
    %v76 = vpop.permute.xlu0 %75
    %79 = vset.pattern.permute.xlu0 0
    %80 = vperm.xlu0 %79, %v50
    %v81 = vpop.permute.xlu0 %80
    %84 = vset.pattern.permute.xlu0 0
    %85 = vperm.xlu0 %84, %v51
    %v86 = vpop.permute.xlu0 %85
    %89 = vset.pattern.permute.xlu0 0
    %90 = vperm.xlu0 %89, %v52
    %v91 = vpop.permute.xlu0 %90
    %94 = vset.pattern.permute.xlu0 0
    %95 = vperm.xlu0 %94, %v53
    %v96 = vpop.permute.xlu0 %95
    %99 = vset.pattern.permute.xlu0 0
    %100 = vperm.xlu0 %99, %v54
    %v101 = vpop.permute.xlu0 %100
    %104 = vset.pattern.permute.xlu0 0
    %105 = vperm.xlu0 %104, %v55
    %v106 = vpop.permute.xlu0 %105
    %109 = vset.pattern.permute.xlu0 0
    %110 = vperm.xlu0 %109, %v56
    %v111 = vpop.permute.xlu0 %110
    %114 = vset.pattern.permute.xlu0 0
    %115 = vperm.xlu0 %114, %v57
    %v116 = vpop.permute.xlu0 %115
    %119 = vset.pattern.permute.xlu0 0
    %120 = vperm.xlu0 %119, %v58
    %v121 = vpop.permute.xlu0 %120
    %124 = vset.pattern.permute.xlu0 0
    %125 = vperm.xlu0 %124, %v59
    %v126 = vpop.permute.xlu0 %125
    %129 = vset.pattern.permute.xlu0 0
    %130 = vperm.xlu0 %129, %v60
    %v131 = vpop.permute.xlu0 %130
    %134 = vset.pattern.permute.xlu0 0
    %135 = vperm.xlu0 %134, %v61
    %v136 = vpop.permute.xlu0 %135
    %139 = vset.pattern.permute.xlu0 0
    %140 = vperm.xlu0 %139, %v62
    %v141 = vpop.permute.xlu0 %140
    %v159 = vunpack.c.l.b16 %v31
    %v160 = vunpack.c.l.b16 %v32
    %v161 = vunpack.c.l.b16 %v33
    %v162 = vunpack.c.l.b16 %v34
    %v163 = vunpack.c.l.b16 %v35
    %v164 = vunpack.c.l.b16 %v36
    %v165 = vunpack.c.l.b16 %v37
    %v166 = vunpack.c.l.b16 %v38
    %v167 = vunpack.c.l.b16 %v39
    %v168 = vunpack.c.l.b16 %v40
    %v169 = vunpack.c.l.b16 %v41
    %v170 = vunpack.c.l.b16 %v42
    %v171 = vunpack.c.l.b16 %v43
    %v172 = vunpack.c.l.b16 %v44
    %v173 = vunpack.c.l.b16 %v45
    %v174 = vunpack.c.l.b16 %v46
    %v175 = vpack.c.b16 %v160, %v159
    %v176 = vpack.c.b16 %v162, %v161
    %v177 = vpack.c.b16 %v164, %v163
    %v178 = vpack.c.b16 %v166, %v165
    %v179 = vpack.c.b16 %v168, %v167
    %v180 = vpack.c.b16 %v170, %v169
    %v181 = vpack.c.b16 %v172, %v171
    %v182 = vpack.c.b16 %v174, %v173
    %v185 = vunpack.c.l.b16 %v29
    %v186 = vunpack.c.l.b16 %v30
    %v187 = vpack.c.b16 %v186, %v185
    %vm189 = vcmask 130048
    %v191 = vsel %vm189, %v175, 0
    %v194 = vsel %vm189, %v176, 0
    %v197 = vsel %vm189, %v177, 0
    %v200 = vsel %vm189, %v178, 0
    %v203 = vsel %vm189, %v179, 0
    %v206 = vsel %vm189, %v180, 0
    %v209 = vsel %vm189, %v181, 0
    %v212 = vsel %vm189, %v182, 0
    %214 = vmatprep.subr.bf16.mxu0 0
    %215 = vmatpush1.bf16.msra.mxu0 %v187
    %216 = vmatprep.subr.bf16.mxu0 0
    %217 = vmatpush1.bf16.msra.mxu0 0
    %218 = vmatprep.subr.bf16.mxu0 0
    %219 = vmatpush1.bf16.msra.mxu0 0
    %220 = vmatprep.subr.bf16.mxu0 0
    %221 = vmatpush1.bf16.msra.mxu0 0
    %222 = vmatprep.subr.bf16.mxu0 0
    %223 = vmatpush1.bf16.msra.mxu0 0
    %224 = vmatprep.subr.bf16.mxu0 0
    %225 = vmatpush1.bf16.msra.mxu0 0
    %226 = vmatprep.subr.bf16.mxu0 0
    %227 = vmatpush1.bf16.msra.mxu0 0
    %228 = vmatprep.subr.bf16.mxu0 0
    %229 = vmatpush1.bf16.msra.mxu0 0
    %230 = vmatprep.subr.bf16.mxu0 0
    %231 = vmatpush1.bf16.msra.mxu0 0
    %232 = vmatprep.subr.bf16.mxu0 0
    %233 = vmatpush1.bf16.msra.mxu0 0
    %234 = vmatprep.subr.bf16.mxu0 0
    %235 = vmatpush1.bf16.msra.mxu0 0
    %236 = vmatprep.subr.bf16.mxu0 0
    %237 = vmatpush1.bf16.msra.mxu0 0
    %238 = vmatprep.subr.bf16.mxu0 0
    %239 = vmatpush1.bf16.msra.mxu0 0
    %240 = vmatprep.subr.bf16.mxu0 0
    %241 = vmatpush1.bf16.msra.mxu0 0
    %242 = vmatprep.subr.bf16.mxu0 0
    %243 = vmatpush1.bf16.msra.mxu0 0
    %244 = vmatprep.subr.bf16.mxu0 0
    %245 = vmatpush1.bf16.msra.mxu0 0
    %246 = vmatprep.mubr.bf16.mxu0 0
    %247 = vmatmul.mubr.bf16.gmra.mrb[0].mxu0 %v191
    %v248 = vpop.f32.mrb[0].mxu0
    %v249 = vadd.f32 %v66, %v248
    %v250 = vpop.f32.mrb[0].mxu0
    %v251 = vpop.f32.mrb[0].mxu0
    %v252 = vadd.f32 %v71, %v251
    %v253 = vpop.f32.mrb[0].mxu0
    %254 = vmatprep.mubr.bf16.mxu0 0
    %255 = vmatmul.mubr.bf16.gmra.mrb[0].mxu0 %v194
    %v256 = vpop.f32.mrb[0].mxu0
    %v257 = vadd.f32 %v76, %v256
    %v258 = vpop.f32.mrb[0].mxu0
    %v259 = vpop.f32.mrb[0].mxu0
    %v260 = vadd.f32 %v81, %v259
    %v261 = vpop.f32.mrb[0].mxu0
    %262 = vmatprep.mubr.bf16.mxu0 0
    %263 = vmatmul.mubr.bf16.gmra.mrb[0].mxu0 %v197
    %v264 = vpop.f32.mrb[0].mxu0
    %v265 = vadd.f32 %v86, %v264
    %v266 = vpop.f32.mrb[0].mxu0
    %v267 = vpop.f32.mrb[0].mxu0
    %v268 = vadd.f32 %v91, %v267
    %v269 = vpop.f32.mrb[0].mxu0
    %270 = vmatprep.mubr.bf16.mxu0 0
    %271 = vmatmul.mubr.bf16.gmra.mrb[0].mxu0 %v200
    %v272 = vpop.f32.mrb[0].mxu0
    %v273 = vadd.f32 %v96, %v272
    %v274 = vpop.f32.mrb[0].mxu0
    %v275 = vpop.f32.mrb[0].mxu0
    %v276 = vadd.f32 %v101, %v275
    %v277 = vpop.f32.mrb[0].mxu0
    %278 = vmatprep.mubr.bf16.mxu0 0
    %279 = vmatmul.mubr.bf16.gmra.mrb[0].mxu0 %v203
    %v280 = vpop.f32.mrb[0].mxu0
    %v281 = vadd.f32 %v106, %v280
    %v282 = vpop.f32.mrb[0].mxu0
    %v283 = vpop.f32.mrb[0].mxu0
    %v284 = vadd.f32 %v111, %v283
    %v285 = vpop.f32.mrb[0].mxu0
    %286 = vmatprep.mubr.bf16.mxu0 0
    %287 = vmatmul.mubr.bf16.gmra.mrb[0].mxu0 %v206
    %v288 = vpop.f32.mrb[0].mxu0
    %v289 = vadd.f32 %v116, %v288
    %v290 = vpop.f32.mrb[0].mxu0
    %v291 = vpop.f32.mrb[0].mxu0
    %v292 = vadd.f32 %v121, %v291
    %v293 = vpop.f32.mrb[0].mxu0
    %294 = vmatprep.mubr.bf16.mxu0 0
    %295 = vmatmul.mubr.bf16.gmra.mrb[0].mxu0 %v209
    %v296 = vpop.f32.mrb[0].mxu0
    %v297 = vadd.f32 %v126, %v296
    %v298 = vpop.f32.mrb[0].mxu0
    %v299 = vpop.f32.mrb[0].mxu0
    %v300 = vadd.f32 %v131, %v299
    %v301 = vpop.f32.mrb[0].mxu0
    %302 = vmatprep.mubr.bf16.mxu0 0
    %303 = vmatmul.mubr.bf16.gmra.mrb[0].mxu0 %v212
    %v304 = vpop.f32.mrb[0].mxu0
    %v305 = vadd.f32 %v136, %v304
    %v306 = vpop.f32.mrb[0].mxu0
    %v307 = vpop.f32.mrb[0].mxu0
    %v308 = vadd.f32 %v141, %v307
    %v309 = vpop.f32.mrb[0].mxu0
    %310 = vdwg.mxu0
    %v311 = vmax.f32 %v249, 0.0
    %v312 = vmax.f32 %v252, 0.0
    %v313 = vmax.f32 %v257, 0.0
    %v314 = vmax.f32 %v260, 0.0
    %v315 = vmax.f32 %v265, 0.0
    %v316 = vmax.f32 %v268, 0.0
    %v317 = vmax.f32 %v273, 0.0
    %v318 = vmax.f32 %v276, 0.0
    %v319 = vmax.f32 %v281, 0.0
    %v320 = vmax.f32 %v284, 0.0
    %v321 = vmax.f32 %v289, 0.0
    %v322 = vmax.f32 %v292, 0.0
    %v323 = vmax.f32 %v297, 0.0
    %v324 = vmax.f32 %v300, 0.0
    %v325 = vmax.f32 %v305, 0.0
    %v326 = vmax.f32 %v308, 0.0
    %v327 = vld [vmem:[%s3] sm:$0xf]
    %v328 = vld [vmem:[%s3 + $0x4] sm:$0xf]
    %v329 = vld [vmem:[%s3 + $0x8] sm:$0xf]
    %v330 = vld [vmem:[%s3 + $0xc] sm:$0xf]
    %v331 = vld [vmem:[%s3 + $0x10] sm:$0xf]
    %v332 = vld [vmem:[%s3 + $0x14] sm:$0xf]
    %v333 = vld [vmem:[%s3 + $0x18] sm:$0xf]
    %v334 = vld [vmem:[%s3 + $0x1c] sm:$0xf]
    %v335 = vpack.c.bf16 %v312, %v311
    %v336 = vpack.c.bf16 %v314, %v313
    %v337 = vpack.c.bf16 %v316, %v315
    %v338 = vpack.c.bf16 %v318, %v317
    %v339 = vpack.c.bf16 %v320, %v319
    %v340 = vpack.c.bf16 %v322, %v321
    %v341 = vpack.c.bf16 %v324, %v323
    %v342 = vpack.c.bf16 %v326, %v325
    %v343 = vld [vmem:[%s4] sm:$0xff]
    %v344 = vld [vmem:[%s4 + $0x8] sm:$0xff]
    %v345 = vld [vmem:[%s4 + $0x10] sm:$0xff]
    %v346 = vld [vmem:[%s4 + $0x18] sm:$0xff]
    %v347 = vld [vmem:[%s4 + $0x20] sm:$0xff]
    %v348 = vld [vmem:[%s4 + $0x28] sm:$0xff]
    %v349 = vld [vmem:[%s4 + $0x30] sm:$0xff]
    %v350 = vld [vmem:[%s4 + $0x38] sm:$0xff]
    %352 = vset.pattern.permute.xlu0 0
    %353 = vperm.xlu0 %352, %v343
    %v354 = vpop.permute.xlu0 %353
    %357 = vset.pattern.permute.xlu0 0
    %358 = vperm.xlu0 %357, %v344
    %v359 = vpop.permute.xlu0 %358
    %362 = vset.pattern.permute.xlu0 0
    %363 = vperm.xlu0 %362, %v345
    %v364 = vpop.permute.xlu0 %363
    %367 = vset.pattern.permute.xlu0 0
    %368 = vperm.xlu0 %367, %v346
    %v369 = vpop.permute.xlu0 %368
    %372 = vset.pattern.permute.xlu0 0
    %373 = vperm.xlu0 %372, %v347
    %v374 = vpop.permute.xlu0 %373
    %377 = vset.pattern.permute.xlu0 0
    %378 = vperm.xlu0 %377, %v348
    %v379 = vpop.permute.xlu0 %378
    %382 = vset.pattern.permute.xlu0 0
    %383 = vperm.xlu0 %382, %v349
    %v384 = vpop.permute.xlu0 %383
    %387 = vset.pattern.permute.xlu0 0
    %388 = vperm.xlu0 %387, %v350
    %v389 = vpop.permute.xlu0 %388
    %v399 = vunpack.c.l.b16 %v327
    %v400 = vunpack.c.l.b16 %v328
    %v401 = vunpack.c.l.b16 %v329
    %v402 = vunpack.c.l.b16 %v330
    %v403 = vunpack.c.l.b16 %v331
    %v404 = vunpack.c.l.b16 %v332
    %v405 = vunpack.c.l.b16 %v333
    %v406 = vunpack.c.l.b16 %v334
    %v407 = vpack.c.b16 %v400, %v399
    %v408 = vpack.c.b16 %v402, %v401
    %v409 = vpack.c.b16 %v404, %v403
    %v410 = vpack.c.b16 %v406, %v405
    %415 = vmatprep.subr.bf16.mxu0 0
    %416 = vmatpush1.bf16.msra.mxu0 %v335
    %417 = vmatprep.subr.bf16.mxu0 0
    %418 = vmatpush1.bf16.msra.mxu0 %v336
    %419 = vmatprep.subr.bf16.mxu0 0
    %420 = vmatpush1.bf16.msra.mxu0 %v337
    %421 = vmatprep.subr.bf16.mxu0 0
    %422 = vmatpush1.bf16.msra.mxu0 %v338
    %423 = vmatprep.subr.bf16.mxu0 0
    %424 = vmatpush1.bf16.msra.mxu0 %v339
    %425 = vmatprep.subr.bf16.mxu0 0
    %426 = vmatpush1.bf16.msra.mxu0 %v340
    %427 = vmatprep.subr.bf16.mxu0 0
    %428 = vmatpush1.bf16.msra.mxu0 %v341
    %429 = vmatprep.subr.bf16.mxu0 0
    %430 = vmatpush1.bf16.msra.mxu0 %v342
    %431 = vmatprep.subr.bf16.mxu0 0
    %432 = vmatpush1.bf16.msra.mxu0 0
    %433 = vmatprep.subr.bf16.mxu0 0
    %434 = vmatpush1.bf16.msra.mxu0 0
    %435 = vmatprep.subr.bf16.mxu0 0
    %436 = vmatpush1.bf16.msra.mxu0 0
    %437 = vmatprep.subr.bf16.mxu0 0
    %438 = vmatpush1.bf16.msra.mxu0 0
    %439 = vmatprep.subr.bf16.mxu0 0
    %440 = vmatpush1.bf16.msra.mxu0 0
    %441 = vmatprep.subr.bf16.mxu0 0
    %442 = vmatpush1.bf16.msra.mxu0 0
    %443 = vmatprep.subr.bf16.mxu0 0
    %444 = vmatpush1.bf16.msra.mxu0 0
    %445 = vmatprep.subr.bf16.mxu0 0
    %446 = vmatpush1.bf16.msra.mxu0 0
    %447 = vmatprep.mubr.bf16.mxu0 0
    %448 = vmatmul.mubr.bf16.gmra.mrb[0].mxu0 %v407
    %v449 = vpop.f32.mrb[0].mxu0
    %v450 = vadd.f32 %v354, %v449
    %v451 = vpop.f32.mrb[0].mxu0
    %v452 = vpop.f32.mrb[0].mxu0
    %v453 = vadd.f32 %v359, %v452
    %v454 = vpop.f32.mrb[0].mxu0
    %455 = vmatprep.mubr.bf16.mxu0 0
    %456 = vmatmul.mubr.bf16.gmra.mrb[0].mxu0 %v408
    %v457 = vpop.f32.mrb[0].mxu0
    %v458 = vadd.f32 %v364, %v457
    %v459 = vpop.f32.mrb[0].mxu0
    %v460 = vpop.f32.mrb[0].mxu0
    %v461 = vadd.f32 %v369, %v460
    %v462 = vpop.f32.mrb[0].mxu0
    %463 = vmatprep.mubr.bf16.mxu0 0
    %464 = vmatmul.mubr.bf16.gmra.mrb[0].mxu0 %v409
    %v465 = vpop.f32.mrb[0].mxu0
    %v466 = vadd.f32 %v374, %v465
    %v467 = vpop.f32.mrb[0].mxu0
    %v468 = vpop.f32.mrb[0].mxu0
    %v469 = vadd.f32 %v379, %v468
    %v470 = vpop.f32.mrb[0].mxu0
    %471 = vmatprep.mubr.bf16.mxu0 0
    %472 = vmatmul.mubr.bf16.gmra.mrb[0].mxu0 %v410
    %v473 = vpop.f32.mrb[0].mxu0
    %v474 = vadd.f32 %v384, %v473
    %v475 = vpop.f32.mrb[0].mxu0
    %v476 = vpop.f32.mrb[0].mxu0
    %v477 = vadd.f32 %v389, %v476
    %v478 = vpop.f32.mrb[0].mxu0
    %479 = vdwg.mxu0
    %v480 = vmax.f32 %v450, 0.0
    %v481 = vmax.f32 %v453, 0.0
    %v482 = vmax.f32 %v458, 0.0
    %v483 = vmax.f32 %v461, 0.0
    %v484 = vmax.f32 %v466, 0.0
    %v485 = vmax.f32 %v469, 0.0
    %v486 = vmax.f32 %v474, 0.0
    %v487 = vmax.f32 %v477, 0.0
    %v488 = vld [vmem:[%s5] sm:$0x1]
    %v489 = vpack.c.bf16 %v481, %v480
    %v490 = vpack.c.bf16 %v483, %v482
    %v491 = vpack.c.bf16 %v485, %v484
    %v492 = vpack.c.bf16 %v487, %v486
    %s493 = sld [smem:[#allocation2]]
    %v494 = vstv %s493
    %vm495 = vcmask 523264
    %v497 = vsel %vm495, %v488, 0
    %499 = vmatprep.subr.bf16.mxu0 0
    %500 = vmatpush1.bf16.msra.mxu0 %v489
    %501 = vmatprep.subr.bf16.mxu0 0
    %502 = vmatpush1.bf16.msra.mxu0 %v490
    %503 = vmatprep.subr.bf16.mxu0 0
    %504 = vmatpush1.bf16.msra.mxu0 %v491
    %505 = vmatprep.subr.bf16.mxu0 0
    %506 = vmatpush1.bf16.msra.mxu0 %v492
    %507 = vmatprep.subr.bf16.mxu0 0
    %508 = vmatpush1.bf16.msra.mxu0 0
    %509 = vmatprep.subr.bf16.mxu0 0
    %510 = vmatpush1.bf16.msra.mxu0 0
    %511 = vmatprep.subr.bf16.mxu0 0
    %512 = vmatpush1.bf16.msra.mxu0 0
    %513 = vmatprep.subr.bf16.mxu0 0
    %514 = vmatpush1.bf16.msra.mxu0 0
    %515 = vmatprep.subr.bf16.mxu0 0
    %516 = vmatpush1.bf16.msra.mxu0 0
    %517 = vmatprep.subr.bf16.mxu0 0
    %518 = vmatpush1.bf16.msra.mxu0 0
    %519 = vmatprep.subr.bf16.mxu0 0
    %520 = vmatpush1.bf16.msra.mxu0 0
    %521 = vmatprep.subr.bf16.mxu0 0
    %522 = vmatpush1.bf16.msra.mxu0 0
    %523 = vmatprep.subr.bf16.mxu0 0
    %524 = vmatpush1.bf16.msra.mxu0 0
    %525 = vmatprep.subr.bf16.mxu0 0
    %526 = vmatpush1.bf16.msra.mxu0 0
    %527 = vmatprep.subr.bf16.mxu0 0
    %528 = vmatpush1.bf16.msra.mxu0 0
    %529 = vmatprep.subr.bf16.mxu0 0
    %530 = vmatpush1.bf16.msra.mxu0 0
    %531 = vmatprep.mubr.bf16.mxu0 0
    %532 = vmatmul.mubr.bf16.gmra.mrb[0].mxu0 %v497
    %v533 = vpop.f32.mrb[0].mxu0
    %v534 = vadd.f32 %v494, %v533
    %v535 = vpop.f32.mrb[0].mxu0
    %v536 = vpop.f32.mrb[0].mxu0
    %v537 = vpop.f32.mrb[0].mxu0
    %538 = vdwg.mxu0
    %539 = vst [vmem:[#allocation3] sm:$0x1] %v534
    // Predicated region
    $region30: #{tpu_custom_call.1} parent=1 // pred_check
      _
    $region31: #{tpu_custom_call.1} parent=1 // pred_check_branch
      %541 = sbr.rel (0) target = $region33
    $region32: #{tpu_custom_call.1} parent=1 // pred_region
      %s543 = ssub.s32 16, 16
      %544 = vsyncadd [#allocation4], %s543
      %s546 = sshll.u32 [#allocation3], 4
      %s547 = int_to_ptr.vmem [resolvable:$true] %s546
      %549 = dma.vmem_to_hbm [thread:$0]  %s547, 16, %s7, [#allocation4]
    $region33: #{tpu_custom_call.1} parent=1 // pred_fallthru
      _
    // Predicated region
    $region34: #{tpu_custom_call.1} parent=1 // pred_check
      _
    $region35: #{tpu_custom_call.1} parent=1 // pred_check_branch
      %551 = sbr.rel (0) target = $region37
    $region36: #{tpu_custom_call.1} parent=1 // pred_region
      %552 = dma.done [#allocation4], 16
    $region37: #{tpu_custom_call.1} parent=1 // pred_fallthru
      _
    %553 = vsyncpa [#allocation4], 1

</llo_original>
